<compile_context>
chip_gen: v5e
topology: v5e:2x2
jax: 0.10.0
libtpu: 0.0.40
codegen_flags: <defaults>
</compile_context>

<pallas_src>
import jax
import jax.numpy as jnp
from jax.experimental import pallas as pl
from jax.experimental.pallas import tpu as pltpu


def _cdiv(a: int, b: int) -> int:
    return -(-a // b)


def _round_up(x: int, m: int) -> int:
    return _cdiv(x, m) * m


def _fit_tile(dim: int, max_tile: int, align: int) -> int:
    """Largest aligned tile that splits `dim` with minimal padding."""
    if dim <= max_tile:
        return _round_up(dim, align)
    n_tiles = _cdiv(dim, max_tile)
    return _round_up(_cdiv(dim, n_tiles), align)


def _finalize(vsum, row_sum, d_real, mask_ones_col):
    """out = (vsum/row_sum) / max(||vsum/row_sum||, 1e-12), fused to one scale."""
    if mask_ones_col:
        # Exclude the ones-column (holds row_sum) from the norm and the output.
        col = jax.lax.broadcasted_iota(jnp.int32, vsum.shape, dimension=1)
        vsum = jnp.where(col == d_real, jnp.float32(0.0), vsum)
    sq_vsum = jnp.sum(vsum * vsum, axis=1, keepdims=True)            # [tm, 1]
    # Clamp keeps padded-M rows (row_sum == 0) finite; real rows have
    # row_sum >> 1e-30 so semantics are unchanged.  EUP reciprocal; its approx
    # error cancels exactly against the rsqrt below on the non-eps path.
    inv_row = pl.reciprocal(jnp.maximum(row_sum, jnp.float32(1e-30)), approx=True)
    sq_global = sq_vsum * inv_row * inv_row
    # F.normalize eps: x / max(||x||, 1e-12) == x * rsqrt(max(||x||^2, 1e-24))
    inv_norm = jax.lax.rsqrt(jnp.maximum(sq_global, jnp.float32(1e-24)))
    return vsum * (inv_row * inv_norm)


def _make_resident_kernel(d_real: int, use_ones_col: bool):
    """1-D grid over M; full-width mask tile, emb resident in VMEM."""
    def kernel(mask_ref, emb_ref, out_ref):
        mask = mask_ref[...]
        vsum = jnp.dot(mask, emb_ref[...], preferred_element_type=jnp.float32)
        if use_ones_col:
            row_sum = vsum[:, d_real:d_real + 1]                      # from the MXU
        else:
            row_sum = jnp.sum(mask, axis=1, keepdims=True, dtype=jnp.float32)
        out_ref[...] = _finalize(vsum, row_sum, d_real, use_ones_col).astype(out_ref.dtype)
    return kernel


def _make_streamed_kernel(d_real: int, use_ones_col: bool):
    """2-D grid (M parallel, K arbitrary); accumulate directly into out_ref."""
    if use_ones_col:
        def kernel(mask_ref, emb_ref, out_ref):
            k = pl.program_id(1)

            @pl.when(k == 0)
            def _init():
                out_ref[...] = jnp.zeros_like(out_ref)

            out_ref[...] += jnp.dot(mask_ref[...], emb_ref[...],
                                    preferred_element_type=jnp.float32)

            @pl.when(k == pl.num_programs(1) - 1)
            def _fin():
                vsum = out_ref[...]
                row_sum = vsum[:, d_real:d_real + 1]
                out_ref[...] = _finalize(vsum, row_sum, d_real, True).astype(out_ref.dtype)
        return kernel

    def kernel(mask_ref, emb_ref, out_ref, rowsum_ref):
        k = pl.program_id(1)

        @pl.when(k == 0)
        def _init():
            out_ref[...] = jnp.zeros_like(out_ref)
            rowsum_ref[...] = jnp.zeros_like(rowsum_ref)

        mask = mask_ref[...]
        out_ref[...] += jnp.dot(mask, emb_ref[...],
                                preferred_element_type=jnp.float32)
        rowsum_ref[...] += jnp.sum(mask, axis=1, keepdims=True, dtype=jnp.float32)

        @pl.when(k == pl.num_programs(1) - 1)
        def _fin():
            out_ref[...] = _finalize(out_ref[...], rowsum_ref[...],
                                     d_real, False).astype(out_ref.dtype)
    return kernel


_VMEM_BUDGET = 20 * 1024 * 1024   # target working set (fits v7x 32 MiB scoped default)
_VMEM_LIMIT = 32 * 1024 * 1024    # explicit scoped limit: safe on v5e/v6e/v7x


def avg_readout(emb: jax.Array, mask: jax.Array,
                *, tile_m: int = 512, tile_k: int = 1024,
                vmem_budget_bytes: int = _VMEM_BUDGET) -> jax.Array:
    """Pallas implementation of AvgReadout.forward(emb, mask). Returns f32."""
    M, N = mask.shape
    N2, D = emb.shape
    assert N == N2, "mask.shape[1] must equal emb.shape[0]"

    msz = jnp.dtype(mask.dtype).itemsize
    esz = jnp.dtype(emb.dtype).itemsize

    d_pad = _round_up(D, 128)            # lane-dense output (unmasked vst)
    use_ones_col = d_pad > D             # free pad column -> row_sum on the MXU

    # M tile: minimal-padding fit, then make sure the parallel axis has >= 2
    # blocks when possible so both v7x TensorCores are used.
    tm = _fit_tile(M, tile_m, 8)
    if M >= 16 and _round_up(M, tm) // tm < 2:
        tm = _round_up(_cdiv(M, 2), 8)

    # ------- path selection: resident emb (1-D grid) vs streamed (2-D grid) ----
    n_full = _round_up(N, 128)
    emb_resident_bytes = 2 * n_full * d_pad * esz          # double-buffered worst case
    resident = False
    if emb_resident_bytes <= vmem_budget_bytes // 2:
        per_row = 2 * (n_full * msz + d_pad * 4)           # mask row + out row (dbl-buf)
        tm_budget = ((vmem_budget_bytes - emb_resident_bytes) // per_row) // 8 * 8
        if tm_budget >= 8:
            resident = True
            tm = min(tm, tm_budget)

    if resident:
        n_pad = n_full
        m_pad = _round_up(M, tm)
        grid = (m_pad // tm,)
        in_specs = [
            pl.BlockSpec((tm, n_pad), lambda i: (i, 0)),        # mask M-tile, full width
            pl.BlockSpec((n_pad, d_pad), lambda i: (0, 0)),     # emb: fetched once, resident
        ]
        out_specs = pl.BlockSpec((tm, d_pad), lambda i: (i, 0))
        scratch_shapes = ()
        kernel = _make_resident_kernel(D, use_ones_col)
        dim_sem = ("parallel",)
        bytes_accessed = (m_pad * n_pad * msz          # mask read once
                          + n_pad * d_pad * esz        # emb read once
                          + m_pad * d_pad * 4)         # out written once
    else:
        tk = _fit_tile(N, tile_k, 128)

        def _streamed_bytes(tm_, tk_):
            rs = 0 if use_ones_col else tm_ * 128 * 4  # (tm,1) f32 pads lanes to 128
            return (2 * tm_ * tk_ * msz + 2 * tk_ * d_pad * esz
                    + 2 * tm_ * d_pad * 4 + rs)

        while _streamed_bytes(tm, tk) > vmem_budget_bytes and tk > 128:
            tk = max(128, _round_up(tk // 2, 128))
        while _streamed_bytes(tm, tk) > vmem_budget_bytes and tm > 8:
            tm = max(8, _round_up(tm // 2, 8))

        n_pad = _round_up(N, tk)
        m_pad = _round_up(M, tm)
        grid = (m_pad // tm, n_pad // tk)
        in_specs = [
            pl.BlockSpec((tm, tk), lambda i, k: (i, k)),        # mask tile
            pl.BlockSpec((tk, d_pad), lambda i, k: (k, 0)),     # emb K-tile
        ]
        out_specs = pl.BlockSpec((tm, d_pad), lambda i, k: (i, 0))
        scratch_shapes = () if use_ones_col else (pltpu.VMEM((tm, 1), jnp.float32),)
        kernel = _make_streamed_kernel(D, use_ones_col)
        dim_sem = ("parallel", "arbitrary")
        bytes_accessed = (m_pad * n_pad * msz
                          + grid[0] * n_pad * d_pad * esz       # emb re-read per M tile
                          + m_pad * d_pad * 4)

    # Zero-pad inputs (zeros contribute nothing to vsum / row_sum / the norm of
    # real rows; padded rows/cols are sliced off below).
    mask_p = mask
    if (m_pad, n_pad) != (M, N):
        mask_p = jnp.pad(mask, ((0, m_pad - M), (0, n_pad - N)))
    emb_p = emb
    if (n_pad, d_pad) != (N, D):
        emb_p = jnp.pad(emb, ((0, n_pad - N), (0, d_pad - D)))
    if use_ones_col:
        # Ones column at index D: acc[:, D] accumulates row_sum on the MXU.
        emb_p = emb_p.at[:, D].set(jnp.ones((), emb_p.dtype))

    cost = pl.CostEstimate(
        flops=2 * m_pad * n_pad * d_pad,
        transcendentals=2 * m_pad,                   # reciprocal + rsqrt per row
        bytes_accessed=int(bytes_accessed),
    )

    out_padded = pl.pallas_call(
        kernel,
        out_shape=jax.ShapeDtypeStruct((m_pad, d_pad), jnp.float32),
        grid_spec=pltpu.PrefetchScalarGridSpec(
            num_scalar_prefetch=0,
            grid=grid,
            in_specs=in_specs,
            out_specs=out_specs,
            scratch_shapes=scratch_shapes,
        ),
        compiler_params=pltpu.CompilerParams(
            dimension_semantics=dim_sem,
            vmem_limit_bytes=_VMEM_LIMIT,
        ),
        cost_estimate=cost,
    )(mask_p, emb_p)

    return out_padded[:M, :D]


def _reference(emb, mask):
    """Pure-JAX reference mirroring the PyTorch forward exactly."""
    vsum = mask @ emb
    row_sum = jnp.sum(mask, axis=1)
    global_emb = vsum / row_sum[:, None]
    norm = jnp.linalg.norm(global_emb, axis=1, keepdims=True)
    return global_emb / jnp.maximum(norm, 1e-12)


if __name__ == "__main__":
    key = jax.random.PRNGKey(0)
    k_mask, k_emb = jax.random.split(key)

    M, N, D = 8, 16, 32  # M pooled graphs, N nodes, D hidden dim

    # Non-negative pooling weights with strictly positive row sums (as the
    # PyTorch module's divide assumes).
    mask = jax.random.uniform(k_mask, (M, N), dtype=jnp.float32) + 0.1
    emb = jax.random.normal(k_emb, (N, D), dtype=jnp.float32)

    out = avg_readout(emb, mask)
    jax.block_until_ready(out)

    ref = _reference(emb, mask)
    assert out.shape == (M, D)
    assert jnp.allclose(out, ref, atol=1e-5, rtol=1e-5), "mismatch vs reference"

    print("KERNEL_OK")
</pallas_src>

<mosaic_0001>
module attributes {stable_mosaic.version = 11 : i64} {
  func.func @kernel(%arg0: i32, %arg1: memref<8x128xf32, #tpu.memory_space<vmem>>, %arg2: memref<128x128xf32, #tpu.memory_space<vmem>>, %arg3: memref<8x128xf32, #tpu.memory_space<vmem>>) attributes {dimension_semantics = [#tpu.dimension_semantics<parallel>], iteration_bounds = array<i64: 1>, scalar_prefetch = 0 : i64, scratch_operands = 0 : i64, tpu.core_type = #tpu.core_type<tc>, window_params = [{transform_indices = @transform_0, window_bounds = array<i64: 8, 128>}, {pipeline_mode = #tpu.pipeline_mode<synchronous>, transform_indices = @transform_1, window_bounds = array<i64: 128, 128>}, {transform_indices = @transform_2, window_bounds = array<i64: 8, 128>}]} {
    %c0 = arith.constant 0 : index
    %c0_0 = arith.constant 0 : index
    %0 = vector.load %arg1[%c0, %c0_0] : memref<8x128xf32, #tpu.memory_space<vmem>>, vector<8x128xf32>
    %c0_1 = arith.constant 0 : index
    %c0_2 = arith.constant 0 : index
    %1 = vector.load %arg2[%c0_1, %c0_2] : memref<128x128xf32, #tpu.memory_space<vmem>>, vector<128x128xf32>
    %cst = arith.constant dense<0.000000e+00> : vector<8x128xf32>
    %2 = tpu.matmul %0, %1, %cst {dimension_numbers = #tpu.dot_dimension_numbers<[1], [0], [0], [1], [0, 0, 1, 1], [], []>} : vector<8x128xf32>, vector<128x128xf32>, vector<8x128xf32> -> vector<8x128xf32>
    %3 = vector.extract_strided_slice %2 {offsets = [0, 32], sizes = [8, 1], strides = [1, 1]} : vector<8x128xf32> to vector<8x1xf32>
    %4 = tpu.iota {dimensions = array<i32: 1>} : vector<8x128xi32>
    %c32_i32 = arith.constant 32 : i32
    %5 = vector.broadcast %c32_i32 : i32 to vector<8x128xi32>
    %6 = arith.cmpi eq, %4, %5 : vector<8x128xi32>
    %cst_3 = arith.constant 0.000000e+00 : f32
    %7 = vector.broadcast %cst_3 : f32 to vector<8x128xf32>
    %8 = arith.select %6, %7, %2 : vector<8x128xi1>, vector<8x128xf32>
    %9 = arith.mulf %8, %8 : vector<8x128xf32>
    %cst_4 = arith.constant dense<0.000000e+00> : vector<8xf32>
    %10 = vector.multi_reduction <add>, %9, %cst_4 [1] : vector<8x128xf32> to vector<8xf32>
    %11 = vector.shape_cast %10 : vector<8xf32> to vector<8x1xf32>
    %cst_5 = arith.constant 1.000000e-30 : f32
    %12 = vector.broadcast %cst_5 : f32 to vector<8x1xf32>
    %13 = arith.maximumf %3, %12 : vector<8x1xf32>
    %14 = tpu.reciprocal %13 {approx = true} : vector<8x1xf32> -> vector<8x1xf32>
    %15 = arith.mulf %11, %14 : vector<8x1xf32>
    %16 = arith.mulf %15, %14 : vector<8x1xf32>
    %cst_6 = arith.constant 1.000000e-24 : f32
    %17 = vector.broadcast %cst_6 : f32 to vector<8x1xf32>
    %18 = arith.maximumf %16, %17 : vector<8x1xf32>
    %19 = math.rsqrt %18 : vector<8x1xf32>
    %20 = arith.mulf %14, %19 : vector<8x1xf32>
    %21 = vector.broadcast %20 : vector<8x1xf32> to vector<8x128xf32>
    %22 = arith.mulf %8, %21 : vector<8x128xf32>
    %c0_7 = arith.constant 0 : index
    %c0_8 = arith.constant 0 : index
    %23 = vector.load %arg3[%c0_7, %c0_8] : memref<8x128xf32, #tpu.memory_space<vmem>>, vector<8x128xf32>
    tpu.vector_store %arg3[%c0_7, %c0_8], %22 {strides = array<i32>} : memref<8x128xf32, #tpu.memory_space<vmem>>, vector<8x128xf32>,
    return
  }
  func.func @transform_0(%arg0: i32) -> (i32, i32) {
    %c0_i32 = arith.constant 0 : i32
    %c0_i32_0 = arith.constant 0 : i32
    return %arg0, %c0_i32 : i32, i32
  }
  func.func @transform_1(%arg0: i32) -> (i32, i32) {
    %c0_i32 = arith.constant 0 : i32
    %c0_i32_0 = arith.constant 0 : i32
    %c0_i32_1 = arith.constant 0 : i32
    return %c0_i32, %c0_i32_0 : i32, i32
  }
  func.func @transform_2(%arg0: i32) -> (i32, i32) {
    %c0_i32 = arith.constant 0 : i32
    %c0_i32_0 = arith.constant 0 : i32
    return %arg0, %c0_i32 : i32, i32
  }
}

</mosaic_0001>

<llo_original>
// kernel: tpu_custom_call.1
$region0: #{tpu_custom_call.1}
  #allocation0 [shape = 'u32[]', space=smem, size = 0x4, offset = 0x4, fixed_abs, tag = 'smem constant byte address 0x4 - core index']
  #allocation1 [shape = 'u32[72,128]{1,0:T(1,128)}', space=vmem, size = 0x9000, scoped, tag = 'internal scratch']
  %s0 = inlined_call_operand.hbm [shape: f32[8,128], index: 0, kind: input, shape index: {}]
  %s1 = inlined_call_operand.hbm [shape: f32[128,128], index: 1, kind: input, shape index: {}]
  %s2 = inlined_call_operand.hbm [shape: f32[8,128], index: 2, kind: output, shape index: {}]
  %s3 = sld [smem:[#allocation0]]
  $region26: #{tpu_custom_call.1} parent=0
    _
  %s5 = ssub.s32 1, %s3
  %s6 = scalar_select 0, %s5, %s3
  $region1: #{tpu_custom_call.1} parent=0
    #allocation2 [shape = 'u8[4096]{0}', space=vmem, size = 0x1000, scoped, tag = 'input window, operand 0, single buffered']
    #allocation3 [shape = 's32[1]{0}', space=sflag, size = 0x4, scoped, tag = 'scoped memory for tpu_custom_call.1']
    #allocation4 [shape = 's32[1]{0}', space=sflag, size = 0x4, scoped, tag = 'scoped memory for tpu_custom_call.1']
    #allocation5 [shape = 'u8[65536]{0}', space=vmem, size = 0x10000, scoped, tag = 'input window, operand 1, single buffered']
    #allocation6 [shape = 's32[1]{0}', space=sflag, size = 0x4, scoped, tag = 'scoped memory for tpu_custom_call.1']
    #allocation7 [shape = 'u8[4096]{0}', space=vmem, size = 0x1000, scoped, tag = 'output window, operand 0, single buffered']
    %7 = vsyncpa [#allocation3], 0
    %8 = vsyncpa [#allocation6], 0
    %9 = vsyncpa [#allocation4], 0
    // Predicated region
    $region2: #{tpu_custom_call.1} parent=1 // pred_check
      _
    $region3: #{tpu_custom_call.1} parent=1 // pred_check_branch
      %11 = sbr.rel (0) target = $region5
    $region4: #{tpu_custom_call.1} parent=1 // pred_region
      %13 = vsyncadd [#allocation3], 0
      %s15 = sshll.u32 %s0, 4
      %s16 = int_to_ptr.hbm [resolvable:$true] %s15
      %s17 = sshll.u32 [#allocation2], 4
      %s18 = int_to_ptr.vmem [resolvable:$true] %s17
      %20 = dma.hbm_to_vmem [thread:$0]  %s16, 128, %s18, [#allocation3]
    $region5: #{tpu_custom_call.1} parent=1 // pred_fallthru
      _
    // Predicated region
    $region6: #{tpu_custom_call.1} parent=1 // pred_check
      _
    $region7: #{tpu_custom_call.1} parent=1 // pred_check_branch
      %22 = sbr.rel (0) target = $region9
    $region8: #{tpu_custom_call.1} parent=1 // pred_region
      %24 = vsyncadd [#allocation6], 0
      %s25 = sshll.u32 %s1, 4
      %s26 = int_to_ptr.hbm [resolvable:$true] %s25
      %s27 = sshll.u32 [#allocation5], 4
      %s28 = int_to_ptr.vmem [resolvable:$true] %s27
      %33 = dma.hbm_to_vmem [thread:$0]  %s26, 2048, %s28, [#allocation6], 128, 128, 8
    $region9: #{tpu_custom_call.1} parent=1 // pred_fallthru
      _
    // Predicated region
    $region10: #{tpu_custom_call.1} parent=1 // pred_check
      _
    $region11: #{tpu_custom_call.1} parent=1 // pred_check_branch
      %35 = sbr.rel (0) target = $region13
    $region12: #{tpu_custom_call.1} parent=1 // pred_region
      %37 = dma.done [#allocation3], 128
    $region13: #{tpu_custom_call.1} parent=1 // pred_fallthru
      _
    // Predicated region
    $region14: #{tpu_custom_call.1} parent=1 // pred_check
      _
    $region15: #{tpu_custom_call.1} parent=1 // pred_check_branch
      %39 = sbr.rel (0) target = $region17
    $region16: #{tpu_custom_call.1} parent=1 // pred_region
      %41 = dma.done [#allocation6], 2048
    $region17: #{tpu_custom_call.1} parent=1 // pred_fallthru
      _
    %v42 = vld [vmem:[#allocation2] sm:$0xff]
    %v43 = vld [vmem:[#allocation5] sm:$0xff]
    %v44 = vld [vmem:[#allocation5 + $0x8] sm:$0xff]
    %v45 = vld [vmem:[#allocation5 + $0x10] sm:$0xff]
    %v46 = vld [vmem:[#allocation5 + $0x18] sm:$0xff]
    %v47 = vld [vmem:[#allocation5 + $0x20] sm:$0xff]
    %v48 = vld [vmem:[#allocation5 + $0x28] sm:$0xff]
    %v49 = vld [vmem:[#allocation5 + $0x30] sm:$0xff]
    %v50 = vld [vmem:[#allocation5 + $0x38] sm:$0xff]
    %v51 = vld [vmem:[#allocation5 + $0x40] sm:$0xff]
    %v52 = vld [vmem:[#allocation5 + $0x48] sm:$0xff]
    %v53 = vld [vmem:[#allocation5 + $0x50] sm:$0xff]
    %v54 = vld [vmem:[#allocation5 + $0x58] sm:$0xff]
    %v55 = vld [vmem:[#allocation5 + $0x60] sm:$0xff]
    %v56 = vld [vmem:[#allocation5 + $0x68] sm:$0xff]
    %v57 = vld [vmem:[#allocation5 + $0x70] sm:$0xff]
    %v58 = vld [vmem:[#allocation5 + $0x78] sm:$0xff]
    %59 = vmatpush.msra.mxu0 %v58
    %60 = vmatpush.msra.mxu0 %v57
    %61 = vmatpush.msra.mxu0 %v56
    %62 = vmatpush.msra.mxu0 %v55
    %63 = vmatpush.msra.mxu0 %v54
    %64 = vmatpush.msra.mxu0 %v53
    %65 = vmatpush.msra.mxu0 %v52
    %66 = vmatpush.msra.mxu0 %v51
    %67 = vmatpush.msra.mxu0 %v50
    %68 = vmatpush.msra.mxu0 %v49
    %69 = vmatpush.msra.mxu0 %v48
    %70 = vmatpush.msra.mxu0 %v47
    %71 = vmatpush.msra.mxu0 %v46
    %72 = vmatpush.msra.mxu0 %v45
    %73 = vmatpush.msra.mxu0 %v44
    %74 = vmatpush.msra.mxu0 %v43
    %75 = vmatmul.f32.gmra.mxu0 %v42
    %v76 = vpop.f32.mrf.mxu0
    %v77 = vadd.f32 0.0, %v76
    %78 = vdwg.mxu0
    %v79 = vlaneseq
    %v80 = vand.u32 %v79, 127
    %vm81 = vcmp.eq.s32.totalorder %v80, 32
    %v82 = vsel %vm81, 0.0, %v77
    %v83 = vmul.f32 %v82, %v82
    %84 = vadd.xlane.f32.xlu0 %v83
    %v85 = vpop.xlane.xlu0 %84
    %v86 = vmax.f32 %v77, 1e-30
    %v87 = vrcp.pop %v86
    %v88 = vmul.f32 %v85, %v87
    %v89 = vmul.f32 %v88, %v87
    %v90 = vmax.f32 %v89, 1e-24
    %v91 = vrsqrt.pop %v90
    %v92 = vmul.f32 %v91, %v90
    %v93 = vmul.f32 %v92, %v91
    %v94 = vmul.f32 0.5, %v93
    %v95 = vsub.f32 1.5, %v94
    %v96 = vmul.f32 %v91, %v95
    %vm97 = vweird.f32 %v90
    %vm98 = vweird.f32 %v91
    %vm99 = vmor %vm97, %vm98
    %v100 = vsel %vm99, %v91, %v96
    %v101 = vmul.f32 %v87, %v100
    %103 = vset.pattern.permute.xlu0 32
    %104 = vperm.xlu0 %103, %v101
    %v105 = vpop.permute.xlu0 %104
    %v107 = vmul.f32 %v82, %v105
    %108 = vst [vmem:[#allocation7] sm:$0xff] %v107
    // Predicated region
    $region18: #{tpu_custom_call.1} parent=1 // pred_check
      _
    $region19: #{tpu_custom_call.1} parent=1 // pred_check_branch
      %110 = sbr.rel (0) target = $region21
    $region20: #{tpu_custom_call.1} parent=1 // pred_region
      %112 = vsyncadd [#allocation4], 0
      %s114 = sshll.u32 [#allocation7], 4
      %s115 = int_to_ptr.vmem [resolvable:$true] %s114
      %s116 = sshll.u32 %s2, 4
      %s117 = int_to_ptr.hbm [resolvable:$true] %s116
      %119 = dma.vmem_to_hbm [thread:$0]  %s115, 128, %s117, [#allocation4]
    $region21: #{tpu_custom_call.1} parent=1 // pred_fallthru
      _
    // Predicated region
    $region22: #{tpu_custom_call.1} parent=1 // pred_check
      _
    $region23: #{tpu_custom_call.1} parent=1 // pred_check_branch
      %121 = sbr.rel (0) target = $region25
    $region24: #{tpu_custom_call.1} parent=1 // pred_region
      %123 = dma.done [#allocation4], 128
    $region25: #{tpu_custom_call.1} parent=1 // pred_fallthru
      _
    %124 = vsyncpa [#allocation3], 1
    %125 = vsyncpa [#allocation6], 1
    %126 = vsyncpa [#allocation4], 1

</llo_original>
